<compile_context>
chip_gen: v7x
topology: tpu7x:2x2x1
jax: 0.10.0
libtpu: 0.0.40
codegen_flags: <defaults>
</compile_context>

<pallas_src>
import jax
import jax.numpy as jnp
from jax.experimental import pallas as pl
from jax.experimental.pallas import tpu as pltpu


def _transmat_kernel(alpha_ref, w_ref, out_ref):
    # Row-wise softmax of the (possibly block-diagonal, -inf padded) unnormalized
    # matrix.  exp(-inf - max) == 0, so padded lanes contribute nothing.
    w = w_ref[...].astype(jnp.float32)
    w_max = jnp.max(w, axis=-1, keepdims=True)
    e = jnp.exp(w - w_max)
    t = e / jnp.sum(e, axis=-1, keepdims=True)

    # einsum('bs,st->bt') == alpha @ T on the MXU, full f32 precision.
    out = jnp.dot(
        alpha_ref[...].astype(jnp.float32),
        t,
        preferred_element_type=jnp.float32,
        precision=jax.lax.Precision.HIGHEST,
    )
    out_ref[...] = out.astype(out_ref.dtype)


def transmat_forward(state_embeddings, alpha, context,
                     unnormalized_transition_matrix, *, row_tile=2048):
    """Pallas implementation of TransMat.forward.

    state_embeddings, context: unused (kept for signature parity with the module).
    alpha: (B, S) float array.
    unnormalized_transition_matrix: (S, S) float parameter.
    row_tile: folded-row tile (each folded row packs 128 // S batch rows).
    """
    del state_embeddings, context  # unused, as in the reference module
    B, S = alpha.shape
    W = unnormalized_transition_matrix
    assert W.shape == (S, S)

    # Lane-dense fold: pack `fold` batch rows into one 128-lane row when possible.
    if S < 128 and 128 % S == 0:
        fold = 128 // S
    else:
        fold = 1  # TODO(synk): state sizes that don't divide 128 keep a sub-128 lane dim.
    SL = S * fold

    # Build the (SL, SL) block-diagonal unnormalized matrix in plain XLA
    # (layout plumbing only; softmax stays inside the kernel).
    if fold > 1:
        w_tiled = jnp.tile(W, (fold, fold))
        blk_r = (jnp.arange(SL) // S)[:, None]
        blk_c = (jnp.arange(SL) // S)[None, :]
        w_in = jnp.where(blk_r == blk_c, w_tiled, jnp.asarray(-jnp.inf, W.dtype))
    else:
        w_in = W

    # Row tiling of the folded batch dimension.
    row_tile = max(8, (int(row_tile) // 8) * 8)
    R = pl.cdiv(B, fold)
    if R <= row_tile:
        tr = R                      # single full-extent block (always legal)
        R_pad = R
    else:
        tr = row_tile
        R_pad = pl.cdiv(R, tr) * tr
    B_pad = R_pad * fold

    alpha_in = alpha
    if B_pad != B:
        alpha_in = jnp.pad(alpha, ((0, B_pad - B), (0, 0)))
    alpha_folded = alpha_in.reshape(R_pad, SL)   # free row-major reshape

    grid = (R_pad // tr,)

    itm = jnp.dtype(alpha.dtype).itemsize
    cost = pl.CostEstimate(
        flops=2 * B_pad * S * SL,
        transcendentals=SL * SL,
        bytes_accessed=(2 * B_pad * S + SL * SL) * itm,
    )

    out_folded = pl.pallas_call(
        _transmat_kernel,
        out_shape=jax.ShapeDtypeStruct((R_pad, SL), alpha.dtype),
        grid=grid,
        in_specs=[
            pl.BlockSpec((tr, SL), lambda i: (i, 0)),   # alpha: tiled over folded batch
            pl.BlockSpec((SL, SL), lambda i: (0, 0)),   # W (block-diag): resident
        ],
        out_specs=pl.BlockSpec((tr, SL), lambda i: (i, 0)),
        compiler_params=pltpu.CompilerParams(
            # No cross-step state -> batch axis can shard across TensorCores (v7x).
            dimension_semantics=("parallel",),
        ),
        cost_estimate=cost,
    )(alpha_folded, w_in)

    out = out_folded.reshape(B_pad, S)
    if B_pad != B:
        out = out[:B]
    return out


def transmat_reference(alpha, w):
    t = jax.nn.softmax(w.astype(jnp.float32), axis=1)
    return jnp.einsum(
        "bs,st->bt", alpha.astype(jnp.float32), t,
        precision=jax.lax.Precision.HIGHEST,
    ).astype(alpha.dtype)


if __name__ == "__main__":
    key = jax.random.PRNGKey(0)
    k_w, k_a1, k_emb, k_ctx, k_a2, k_a3, k_w2, k_a4 = jax.random.split(key, 8)

    num_state = 32   # config.num_state
    batch = 8

    unnormalized_transition_matrix = jax.random.normal(
        k_w, (num_state, num_state), dtype=jnp.float32)
    alpha = jax.random.normal(k_a1, (batch, num_state), dtype=jnp.float32)
    state_embeddings = jax.random.normal(k_emb, (num_state, 16), dtype=jnp.float32)
    context = jax.random.normal(k_ctx, (batch, 16), dtype=jnp.float32)

    # 1) Basic small-batch forward (single lane-dense block).
    out = jax.block_until_ready(
        transmat_forward(state_embeddings, alpha, context,
                         unnormalized_transition_matrix))
    ref = transmat_reference(alpha, unnormalized_transition_matrix)
    assert out.shape == (batch, num_state)
    assert jnp.allclose(out, ref, atol=1e-5, rtol=1e-5)

    # 2) Batch not a multiple of the lane fold (exercises wrapper padding).
    alpha2 = jax.random.normal(k_a2, (1030, num_state), dtype=jnp.float32)
    out2 = jax.block_until_ready(
        transmat_forward(None, alpha2, None, unnormalized_transition_matrix))
    assert out2.shape == (1030, num_state)
    assert jnp.allclose(out2, transmat_reference(alpha2, unnormalized_transition_matrix),
                        atol=1e-5, rtol=1e-5)

    # 3) Multi-tile grid (parallel batch axis) with a reduced row_tile.
    alpha3 = jax.random.normal(k_a3, (4096, num_state), dtype=jnp.float32)
    out3 = jax.block_until_ready(
        transmat_forward(None, alpha3, None, unnormalized_transition_matrix,
                         row_tile=256))
    assert out3.shape == (4096, num_state)
    assert jnp.allclose(out3, transmat_reference(alpha3, unnormalized_transition_matrix),
                        atol=1e-5, rtol=1e-5)

    # 4) State size that does not divide 128 (fold == 1 fallback path).
    s2 = 40
    w2 = jax.random.normal(k_w2, (s2, s2), dtype=jnp.float32)
    alpha4 = jax.random.normal(k_a4, (16, s2), dtype=jnp.float32)
    out4 = jax.block_until_ready(transmat_forward(None, alpha4, None, w2))
    assert out4.shape == (16, s2)
    assert jnp.allclose(out4, transmat_reference(alpha4, w2), atol=1e-5, rtol=1e-5)

    print("KERNEL_OK")
</pallas_src>

<mosaic_0001>
module attributes {stable_mosaic.version = 11 : i64} {
  func.func @_transmat_kernel(%arg0: i32, %arg1: memref<2x128xf32, #tpu.memory_space<vmem>>, %arg2: memref<128x128xf32, #tpu.memory_space<vmem>>, %arg3: memref<2x128xf32, #tpu.memory_space<vmem>>) attributes {dimension_semantics = [#tpu.dimension_semantics<parallel>], iteration_bounds = array<i64: 1>, scalar_prefetch = 0 : i64, scratch_operands = 0 : i64, tpu.core_type = #tpu.core_type<tc>, window_params = [{transform_indices = @transform_0, window_bounds = array<i64: 2, 128>}, {pipeline_mode = #tpu.pipeline_mode<synchronous>, transform_indices = @transform_1, window_bounds = array<i64: 128, 128>}, {transform_indices = @transform_2, window_bounds = array<i64: 2, 128>}]} {
    %c0 = arith.constant 0 : index
    %c0_0 = arith.constant 0 : index
    %0 = vector.load %arg2[%c0, %c0_0] : memref<128x128xf32, #tpu.memory_space<vmem>>, vector<128x128xf32>
    %cst = arith.constant dense<0xFF800000> : vector<128xf32>
    %1 = vector.multi_reduction <maximumf>, %0, %cst [1] : vector<128x128xf32> to vector<128xf32>
    %2 = vector.shape_cast %1 : vector<128xf32> to vector<128x1xf32>
    %3 = vector.broadcast %2 : vector<128x1xf32> to vector<128x128xf32>
    %4 = arith.subf %0, %3 : vector<128x128xf32>
    %5 = math.exp %4 : vector<128x128xf32>
    %cst_1 = arith.constant dense<0.000000e+00> : vector<128xf32>
    %6 = vector.multi_reduction <add>, %5, %cst_1 [1] : vector<128x128xf32> to vector<128xf32>
    %7 = vector.shape_cast %6 : vector<128xf32> to vector<128x1xf32>
    %8 = vector.broadcast %7 : vector<128x1xf32> to vector<128x128xf32>
    %9 = arith.divf %5, %8 : vector<128x128xf32>
    %c0_2 = arith.constant 0 : index
    %c0_3 = arith.constant 0 : index
    %10 = vector.load %arg1[%c0_2, %c0_3] : memref<2x128xf32, #tpu.memory_space<vmem>>, vector<2x128xf32>
    %cst_4 = arith.constant dense<0.000000e+00> : vector<2x128xf32>
    %11 = tpu.matmul %10, %9, %cst_4 {dimension_numbers = #tpu.dot_dimension_numbers<[1], [0], [0], [1], [0, 0, 1, 1], [], []>, precision = #tpu.contract_precision<fp32>} : vector<2x128xf32>, vector<128x128xf32>, vector<2x128xf32> -> vector<2x128xf32>
    %c0_5 = arith.constant 0 : index
    %c0_6 = arith.constant 0 : index
    %12 = vector.load %arg3[%c0_5, %c0_6] : memref<2x128xf32, #tpu.memory_space<vmem>>, vector<2x128xf32>
    tpu.vector_store %arg3[%c0_5, %c0_6], %11 {strides = array<i32>} : memref<2x128xf32, #tpu.memory_space<vmem>>, vector<2x128xf32>,
    return
  }
  func.func @transform_0(%arg0: i32) -> (i32, i32) {
    %c0_i32 = arith.constant 0 : i32
    %c0_i32_0 = arith.constant 0 : i32
    return %arg0, %c0_i32 : i32, i32
  }
  func.func @transform_1(%arg0: i32) -> (i32, i32) {
    %c0_i32 = arith.constant 0 : i32
    %c0_i32_0 = arith.constant 0 : i32
    %c0_i32_1 = arith.constant 0 : i32
    return %c0_i32, %c0_i32_0 : i32, i32
  }
  func.func @transform_2(%arg0: i32) -> (i32, i32) {
    %c0_i32 = arith.constant 0 : i32
    %c0_i32_0 = arith.constant 0 : i32
    return %arg0, %c0_i32 : i32, i32
  }
}

</mosaic_0001>

<llo_original>
// kernel: tpu_custom_call.1
$region0: #{tpu_custom_call.1}
  #allocation0 [shape = 'u32[]', space=smem, size = 0x4, offset = 0x4, fixed_abs, tag = 'smem constant byte address 0x4 - core index']
  #allocation1 [shape = 'u32[144,128]{1,0:T(1,128)}', space=vmem, size = 0x12000, scoped, tag = 'internal scratch']
  %s0 = inlined_call_operand.hbm [shape: f32[2,128], index: 0, kind: input, shape index: {}]
  %s1 = inlined_call_operand.hbm [shape: f32[128,128], index: 1, kind: input, shape index: {}]
  %s2 = inlined_call_operand.hbm [shape: f32[2,128], index: 2, kind: output, shape index: {}]
  %s3 = sld [smem:[#allocation0]]
  $region26: #{tpu_custom_call.1} parent=0
    _
  %s5 = ssub.s32 1, %s3
  %s6 = scalar_select 0, %s5, %s3
  $region1: #{tpu_custom_call.1} parent=0
    #allocation2 [shape = 'u8[1024]{0}', space=vmem, size = 0x400, scoped, tag = 'input window, operand 0, single buffered']
    #allocation3 [shape = 's32[1]{0}', space=sflag, size = 0x4, scoped, tag = 'scoped memory for tpu_custom_call.1']
    #allocation4 [shape = 's32[1]{0}', space=sflag, size = 0x4, scoped, tag = 'scoped memory for tpu_custom_call.1']
    #allocation5 [shape = 'u8[65536]{0}', space=vmem, size = 0x10000, scoped, tag = 'input window, operand 1, single buffered']
    #allocation6 [shape = 's32[1]{0}', space=sflag, size = 0x4, scoped, tag = 'scoped memory for tpu_custom_call.1']
    #allocation7 [shape = 'u8[1024]{0}', space=vmem, size = 0x400, scoped, tag = 'output window, operand 0, single buffered']
    %7 = vsyncpa [#allocation3], 0
    %8 = vsyncpa [#allocation6], 0
    %9 = vsyncpa [#allocation4], 0
    // Predicated region
    $region2: #{tpu_custom_call.1} parent=1 // pred_check
      _
    $region3: #{tpu_custom_call.1} parent=1 // pred_check_branch
      %11 = sbr.rel (0) target = $region5
    $region4: #{tpu_custom_call.1} parent=1 // pred_region
      %s13 = ssub.s32 32, 32
      %14 = vsyncadd [#allocation3], %s13
      %s16 = sshll.u32 [#allocation2], 4
      %s17 = int_to_ptr.vmem [resolvable:$true] %s16
      %19 = dma.hbm_to_vmem [thread:$0]  %s0, 32, %s17, [#allocation3]
    $region5: #{tpu_custom_call.1} parent=1 // pred_fallthru
      _
    // Predicated region
    $region6: #{tpu_custom_call.1} parent=1 // pred_check
      _
    $region7: #{tpu_custom_call.1} parent=1 // pred_check_branch
      %21 = sbr.rel (0) target = $region9
    $region8: #{tpu_custom_call.1} parent=1 // pred_region
      %s23 = ssub.s32 2048, 2048
      %24 = vsyncadd [#allocation6], %s23
      %s25 = sshll.u32 [#allocation5], 4
      %s26 = int_to_ptr.vmem [resolvable:$true] %s25
      %31 = dma.hbm_to_vmem [thread:$0]  %s1, 2048, %s26, [#allocation6], 128, 128, 8
    $region9: #{tpu_custom_call.1} parent=1 // pred_fallthru
      _
    // Predicated region
    $region10: #{tpu_custom_call.1} parent=1 // pred_check
      _
    $region11: #{tpu_custom_call.1} parent=1 // pred_check_branch
      %33 = sbr.rel (0) target = $region13
    $region12: #{tpu_custom_call.1} parent=1 // pred_region
      %34 = dma.done [#allocation3], 32
    $region13: #{tpu_custom_call.1} parent=1 // pred_fallthru
      _
    // Predicated region
    $region14: #{tpu_custom_call.1} parent=1 // pred_check
      _
    $region15: #{tpu_custom_call.1} parent=1 // pred_check_branch
      %36 = sbr.rel (0) target = $region17
    $region16: #{tpu_custom_call.1} parent=1 // pred_region
      %37 = dma.done [#allocation6], 2048
    $region17: #{tpu_custom_call.1} parent=1 // pred_fallthru
      _
    %v38 = vld [vmem:[#allocation5] sm:$0xff]
    %v39 = vld [vmem:[#allocation5 + $0x8] sm:$0xff]
    %v40 = vld [vmem:[#allocation5 + $0x10] sm:$0xff]
    %v41 = vld [vmem:[#allocation5 + $0x18] sm:$0xff]
    %v42 = vld [vmem:[#allocation5 + $0x20] sm:$0xff]
    %v43 = vld [vmem:[#allocation5 + $0x28] sm:$0xff]
    %v44 = vld [vmem:[#allocation5 + $0x30] sm:$0xff]
    %v45 = vld [vmem:[#allocation5 + $0x38] sm:$0xff]
    %v46 = vld [vmem:[#allocation5 + $0x40] sm:$0xff]
    %v47 = vld [vmem:[#allocation5 + $0x48] sm:$0xff]
    %v48 = vld [vmem:[#allocation5 + $0x50] sm:$0xff]
    %v49 = vld [vmem:[#allocation5 + $0x58] sm:$0xff]
    %v50 = vld [vmem:[#allocation5 + $0x60] sm:$0xff]
    %v51 = vld [vmem:[#allocation5 + $0x68] sm:$0xff]
    %v52 = vld [vmem:[#allocation5 + $0x70] sm:$0xff]
    %v53 = vld [vmem:[#allocation5 + $0x78] sm:$0xff]
    %54 = vmax.xlane.f32.xlu0 %v38
    %v55 = vpop.xlane.xlu0 %54
    %56 = vmax.xlane.f32.xlu0 %v39
    %v57 = vpop.xlane.xlu0 %56
    %58 = vmax.xlane.f32.xlu0 %v40
    %v59 = vpop.xlane.xlu0 %58
    %60 = vmax.xlane.f32.xlu0 %v41
    %v61 = vpop.xlane.xlu0 %60
    %62 = vmax.xlane.f32.xlu0 %v42
    %v63 = vpop.xlane.xlu0 %62
    %64 = vmax.xlane.f32.xlu0 %v43
    %v65 = vpop.xlane.xlu0 %64
    %66 = vmax.xlane.f32.xlu0 %v44
    %v67 = vpop.xlane.xlu0 %66
    %68 = vmax.xlane.f32.xlu0 %v45
    %v69 = vpop.xlane.xlu0 %68
    %70 = vmax.xlane.f32.xlu0 %v46
    %v71 = vpop.xlane.xlu0 %70
    %72 = vmax.xlane.f32.xlu0 %v47
    %v73 = vpop.xlane.xlu0 %72
    %74 = vmax.xlane.f32.xlu0 %v48
    %v75 = vpop.xlane.xlu0 %74
    %76 = vmax.xlane.f32.xlu0 %v49
    %v77 = vpop.xlane.xlu0 %76
    %78 = vmax.xlane.f32.xlu0 %v50
    %v79 = vpop.xlane.xlu0 %78
    %80 = vmax.xlane.f32.xlu0 %v51
    %v81 = vpop.xlane.xlu0 %80
    %82 = vmax.xlane.f32.xlu0 %v52
    %v83 = vpop.xlane.xlu0 %82
    %84 = vmax.xlane.f32.xlu0 %v53
    %v85 = vpop.xlane.xlu0 %84
    %v86 = vsub.f32 %v38, %v55
    %v87 = vsub.f32 %v39, %v57
    %v88 = vsub.f32 %v40, %v59
    %v89 = vsub.f32 %v41, %v61
    %v90 = vsub.f32 %v42, %v63
    %v91 = vsub.f32 %v43, %v65
    %v92 = vsub.f32 %v44, %v67
    %v93 = vsub.f32 %v45, %v69
    %v94 = vsub.f32 %v46, %v71
    %v95 = vsub.f32 %v47, %v73
    %v96 = vsub.f32 %v48, %v75
    %v97 = vsub.f32 %v49, %v77
    %v98 = vsub.f32 %v50, %v79
    %v99 = vsub.f32 %v51, %v81
    %v100 = vsub.f32 %v52, %v83
    %v101 = vsub.f32 %v53, %v85
    %v102 = vmul.f32 %v86, 1.442695
    %v103 = vpow.pop %v102
    %v104 = vmul.f32 %v87, 1.442695
    %v105 = vpow.pop %v104
    %v106 = vmul.f32 %v88, 1.442695
    %v107 = vpow.pop %v106
    %v108 = vmul.f32 %v89, 1.442695
    %v109 = vpow.pop %v108
    %v110 = vmul.f32 %v90, 1.442695
    %v111 = vpow.pop %v110
    %v112 = vmul.f32 %v91, 1.442695
    %v113 = vpow.pop %v112
    %v114 = vmul.f32 %v92, 1.442695
    %v115 = vpow.pop %v114
    %v116 = vmul.f32 %v93, 1.442695
    %v117 = vpow.pop %v116
    %v118 = vmul.f32 %v94, 1.442695
    %v119 = vpow.pop %v118
    %v120 = vmul.f32 %v95, 1.442695
    %v121 = vpow.pop %v120
    %v122 = vmul.f32 %v96, 1.442695
    %v123 = vpow.pop %v122
    %v124 = vmul.f32 %v97, 1.442695
    %v125 = vpow.pop %v124
    %v126 = vmul.f32 %v98, 1.442695
    %v127 = vpow.pop %v126
    %v128 = vmul.f32 %v99, 1.442695
    %v129 = vpow.pop %v128
    %v130 = vmul.f32 %v100, 1.442695
    %v131 = vpow.pop %v130
    %v132 = vmul.f32 %v101, 1.442695
    %v133 = vpow.pop %v132
    %134 = vadd.xlane.f32.xlu0 %v103
    %v135 = vpop.xlane.xlu0 %134
    %136 = vadd.xlane.f32.xlu0 %v105
    %v137 = vpop.xlane.xlu0 %136
    %138 = vadd.xlane.f32.xlu0 %v107
    %v139 = vpop.xlane.xlu0 %138
    %140 = vadd.xlane.f32.xlu0 %v109
    %v141 = vpop.xlane.xlu0 %140
    %142 = vadd.xlane.f32.xlu0 %v111
    %v143 = vpop.xlane.xlu0 %142
    %144 = vadd.xlane.f32.xlu0 %v113
    %v145 = vpop.xlane.xlu0 %144
    %146 = vadd.xlane.f32.xlu0 %v115
    %v147 = vpop.xlane.xlu0 %146
    %148 = vadd.xlane.f32.xlu0 %v117
    %v149 = vpop.xlane.xlu0 %148
    %150 = vadd.xlane.f32.xlu0 %v119
    %v151 = vpop.xlane.xlu0 %150
    %152 = vadd.xlane.f32.xlu0 %v121
    %v153 = vpop.xlane.xlu0 %152
    %154 = vadd.xlane.f32.xlu0 %v123
    %v155 = vpop.xlane.xlu0 %154
    %156 = vadd.xlane.f32.xlu0 %v125
    %v157 = vpop.xlane.xlu0 %156
    %158 = vadd.xlane.f32.xlu0 %v127
    %v159 = vpop.xlane.xlu0 %158
    %160 = vadd.xlane.f32.xlu0 %v129
    %v161 = vpop.xlane.xlu0 %160
    %162 = vadd.xlane.f32.xlu0 %v131
    %v163 = vpop.xlane.xlu0 %162
    %164 = vadd.xlane.f32.xlu0 %v133
    %v165 = vpop.xlane.xlu0 %164
    %v166 = vrcp.pop %v135
    %v167 = vmul.f32 %v103, %v166
    %v168 = vrcp.pop %v137
    %v169 = vmul.f32 %v105, %v168
    %v170 = vrcp.pop %v139
    %v171 = vmul.f32 %v107, %v170
    %v172 = vrcp.pop %v141
    %v173 = vmul.f32 %v109, %v172
    %v174 = vrcp.pop %v143
    %v175 = vmul.f32 %v111, %v174
    %v176 = vrcp.pop %v145
    %v177 = vmul.f32 %v113, %v176
    %v178 = vrcp.pop %v147
    %v179 = vmul.f32 %v115, %v178
    %v180 = vrcp.pop %v149
    %v181 = vmul.f32 %v117, %v180
    %v182 = vrcp.pop %v151
    %v183 = vmul.f32 %v119, %v182
    %v184 = vrcp.pop %v153
    %v185 = vmul.f32 %v121, %v184
    %v186 = vrcp.pop %v155
    %v187 = vmul.f32 %v123, %v186
    %v188 = vrcp.pop %v157
    %v189 = vmul.f32 %v125, %v188
    %v190 = vrcp.pop %v159
    %v191 = vmul.f32 %v127, %v190
    %v192 = vrcp.pop %v161
    %v193 = vmul.f32 %v129, %v192
    %v194 = vrcp.pop %v163
    %v195 = vmul.f32 %v131, %v194
    %v196 = vrcp.pop %v165
    %v197 = vmul.f32 %v133, %v196
    %v198 = vld [vmem:[#allocation2] sm:$0x3]
    %199 = vmatprep.subr.mxu0 0.0
    %v200 = vand.u32 %v167, 4294901760
    %201 = vmatpush1.msra.mxu0 %v200
    %202 = vmatprep.subr.mxu0 0.0
    %v203 = vand.u32 %v169, 4294901760
    %204 = vmatpush1.msra.mxu0 %v203
    %205 = vmatprep.subr.mxu0 0.0
    %v206 = vand.u32 %v171, 4294901760
    %207 = vmatpush1.msra.mxu0 %v206
    %208 = vmatprep.subr.mxu0 0.0
    %v209 = vand.u32 %v173, 4294901760
    %210 = vmatpush1.msra.mxu0 %v209
    %211 = vmatprep.subr.mxu0 0.0
    %v212 = vand.u32 %v175, 4294901760
    %213 = vmatpush1.msra.mxu0 %v212
    %214 = vmatprep.subr.mxu0 0.0
    %v215 = vand.u32 %v177, 4294901760
    %216 = vmatpush1.msra.mxu0 %v215
    %217 = vmatprep.subr.mxu0 0.0
    %v218 = vand.u32 %v179, 4294901760
    %219 = vmatpush1.msra.mxu0 %v218
    %220 = vmatprep.subr.mxu0 0.0
    %v221 = vand.u32 %v181, 4294901760
    %222 = vmatpush1.msra.mxu0 %v221
    %223 = vmatprep.subr.mxu0 0.0
    %v224 = vand.u32 %v183, 4294901760
    %225 = vmatpush1.msra.mxu0 %v224
    %226 = vmatprep.subr.mxu0 0.0
    %v227 = vand.u32 %v185, 4294901760
    %228 = vmatpush1.msra.mxu0 %v227
    %229 = vmatprep.subr.mxu0 0.0
    %v230 = vand.u32 %v187, 4294901760
    %231 = vmatpush1.msra.mxu0 %v230
    %232 = vmatprep.subr.mxu0 0.0
    %v233 = vand.u32 %v189, 4294901760
    %234 = vmatpush1.msra.mxu0 %v233
    %235 = vmatprep.subr.mxu0 0.0
    %v236 = vand.u32 %v191, 4294901760
    %237 = vmatpush1.msra.mxu0 %v236
    %238 = vmatprep.subr.mxu0 0.0
    %v239 = vand.u32 %v193, 4294901760
    %240 = vmatpush1.msra.mxu0 %v239
    %241 = vmatprep.subr.mxu0 0.0
    %v242 = vand.u32 %v195, 4294901760
    %243 = vmatpush1.msra.mxu0 %v242
    %244 = vmatprep.subr.mxu0 0.0
    %v245 = vand.u32 %v197, 4294901760
    %246 = vmatpush1.msra.mxu0 %v245
    %247 = vmatprep.subr.mxu0 0.0
    %248 = vmatpush1.msra.mxu0 0.0
    %249 = vmatprep.subr.mxu0 0.0
    %250 = vmatpush1.msra.mxu0 0.0
    %251 = vmatprep.subr.mxu0 0.0
    %252 = vmatpush1.msra.mxu0 0.0
    %253 = vmatprep.subr.mxu0 0.0
    %254 = vmatpush1.msra.mxu0 0.0
    %255 = vmatprep.subr.mxu0 0.0
    %256 = vmatpush1.msra.mxu0 0.0
    %257 = vmatprep.subr.mxu0 0.0
    %258 = vmatpush1.msra.mxu0 0.0
    %259 = vmatprep.subr.mxu0 0.0
    %260 = vmatpush1.msra.mxu0 0.0
    %261 = vmatprep.subr.mxu0 0.0
    %262 = vmatpush1.msra.mxu0 0.0
    %263 = vmatprep.subr.mxu0 0.0
    %264 = vmatpush1.msra.mxu0 0.0
    %265 = vmatprep.subr.mxu0 0.0
    %266 = vmatpush1.msra.mxu0 0.0
    %267 = vmatprep.subr.mxu0 0.0
    %268 = vmatpush1.msra.mxu0 0.0
    %269 = vmatprep.subr.mxu0 0.0
    %270 = vmatpush1.msra.mxu0 0.0
    %271 = vmatprep.subr.mxu0 0.0
    %272 = vmatpush1.msra.mxu0 0.0
    %273 = vmatprep.subr.mxu0 0.0
    %274 = vmatpush1.msra.mxu0 0.0
    %275 = vmatprep.subr.mxu0 0.0
    %276 = vmatpush1.msra.mxu0 0.0
    %277 = vmatprep.subr.mxu0 0.0
    %278 = vmatpush1.msra.mxu0 0.0
    %279 = vmatprep.mubr.f32.mxu0 0.0
    %v280 = vand.u32 %v198, 4294901760
    %v281 = vsub.f32 %v198, %v280
    %v282 = vand.u32 %v281, 4294901760
    %v283 = vsub.f32 %v281, %v282
    %v284 = vand.u32 %v283, 4294901760
    %285 = vmatmul.mubr.f32.gmra.mrb[0].mxu0 %v284
    %v286 = vpop.f32.mrb[0].mxu0
    %v287 = vadd.f32 0.0, %v286
    %v288 = vpop.f32.mrb[0].mxu0
    %289 = vdwg.mxu0
    %290 = vmatprep.subr.mxu0 0.0
    %v291 = vand.u32 %v167, 4294901760
    %v292 = vsub.f32 %v167, %v291
    %v293 = vand.u32 %v292, 4294901760
    %v294 = vsub.f32 %v292, %v293
    %v295 = vand.u32 %v294, 4294901760
    %296 = vmatpush1.msra.mxu0 %v295
    %297 = vmatprep.subr.mxu0 0.0
    %v298 = vand.u32 %v169, 4294901760
    %v299 = vsub.f32 %v169, %v298
    %v300 = vand.u32 %v299, 4294901760
    %v301 = vsub.f32 %v299, %v300
    %v302 = vand.u32 %v301, 4294901760
    %303 = vmatpush1.msra.mxu0 %v302
    %304 = vmatprep.subr.mxu0 0.0
    %v305 = vand.u32 %v171, 4294901760
    %v306 = vsub.f32 %v171, %v305
    %v307 = vand.u32 %v306, 4294901760
    %v308 = vsub.f32 %v306, %v307
    %v309 = vand.u32 %v308, 4294901760
    %310 = vmatpush1.msra.mxu0 %v309
    %311 = vmatprep.subr.mxu0 0.0
    %v312 = vand.u32 %v173, 4294901760
    %v313 = vsub.f32 %v173, %v312
    %v314 = vand.u32 %v313, 4294901760
    %v315 = vsub.f32 %v313, %v314
    %v316 = vand.u32 %v315, 4294901760
    %317 = vmatpush1.msra.mxu0 %v316
    %318 = vmatprep.subr.mxu0 0.0
    %v319 = vand.u32 %v175, 4294901760
    %v320 = vsub.f32 %v175, %v319
    %v321 = vand.u32 %v320, 4294901760
    %v322 = vsub.f32 %v320, %v321
    %v323 = vand.u32 %v322, 4294901760
    %324 = vmatpush1.msra.mxu0 %v323
    %325 = vmatprep.subr.mxu0 0.0
    %v326 = vand.u32 %v177, 4294901760
    %v327 = vsub.f32 %v177, %v326
    %v328 = vand.u32 %v327, 4294901760
    %v329 = vsub.f32 %v327, %v328
    %v330 = vand.u32 %v329, 4294901760
    %331 = vmatpush1.msra.mxu0 %v330
    %332 = vmatprep.subr.mxu0 0.0
    %v333 = vand.u32 %v179, 4294901760
    %v334 = vsub.f32 %v179, %v333
    %v335 = vand.u32 %v334, 4294901760
    %v336 = vsub.f32 %v334, %v335
    %v337 = vand.u32 %v336, 4294901760
    %338 = vmatpush1.msra.mxu0 %v337
    %339 = vmatprep.subr.mxu0 0.0
    %v340 = vand.u32 %v181, 4294901760
    %v341 = vsub.f32 %v181, %v340
    %v342 = vand.u32 %v341, 4294901760
    %v343 = vsub.f32 %v341, %v342
    %v344 = vand.u32 %v343, 4294901760
    %345 = vmatpush1.msra.mxu0 %v344
    %346 = vmatprep.subr.mxu0 0.0
    %v347 = vand.u32 %v183, 4294901760
    %v348 = vsub.f32 %v183, %v347
    %v349 = vand.u32 %v348, 4294901760
    %v350 = vsub.f32 %v348, %v349
    %v351 = vand.u32 %v350, 4294901760
    %352 = vmatpush1.msra.mxu0 %v351
    %353 = vmatprep.subr.mxu0 0.0
    %v354 = vand.u32 %v185, 4294901760
    %v355 = vsub.f32 %v185, %v354
    %v356 = vand.u32 %v355, 4294901760
    %v357 = vsub.f32 %v355, %v356
    %v358 = vand.u32 %v357, 4294901760
    %359 = vmatpush1.msra.mxu0 %v358
    %360 = vmatprep.subr.mxu0 0.0
    %v361 = vand.u32 %v187, 4294901760
    %v362 = vsub.f32 %v187, %v361
    %v363 = vand.u32 %v362, 4294901760
    %v364 = vsub.f32 %v362, %v363
    %v365 = vand.u32 %v364, 4294901760
    %366 = vmatpush1.msra.mxu0 %v365
    %367 = vmatprep.subr.mxu0 0.0
    %v368 = vand.u32 %v189, 4294901760
    %v369 = vsub.f32 %v189, %v368
    %v370 = vand.u32 %v369, 4294901760
    %v371 = vsub.f32 %v369, %v370
    %v372 = vand.u32 %v371, 4294901760
    %373 = vmatpush1.msra.mxu0 %v372
    %374 = vmatprep.subr.mxu0 0.0
    %v375 = vand.u32 %v191, 4294901760
    %v376 = vsub.f32 %v191, %v375
    %v377 = vand.u32 %v376, 4294901760
    %v378 = vsub.f32 %v376, %v377
    %v379 = vand.u32 %v378, 4294901760
    %380 = vmatpush1.msra.mxu0 %v379
    %381 = vmatprep.subr.mxu0 0.0
    %v382 = vand.u32 %v193, 4294901760
    %v383 = vsub.f32 %v193, %v382
    %v384 = vand.u32 %v383, 4294901760
    %v385 = vsub.f32 %v383, %v384
    %v386 = vand.u32 %v385, 4294901760
    %387 = vmatpush1.msra.mxu0 %v386
    %388 = vmatprep.subr.mxu0 0.0
    %v389 = vand.u32 %v195, 4294901760
    %v390 = vsub.f32 %v195, %v389
    %v391 = vand.u32 %v390, 4294901760
    %v392 = vsub.f32 %v390, %v391
    %v393 = vand.u32 %v392, 4294901760
    %394 = vmatpush1.msra.mxu0 %v393
    %395 = vmatprep.subr.mxu0 0.0
    %v396 = vand.u32 %v197, 4294901760
    %v397 = vsub.f32 %v197, %v396
    %v398 = vand.u32 %v397, 4294901760
    %v399 = vsub.f32 %v397, %v398
    %v400 = vand.u32 %v399, 4294901760
    %401 = vmatpush1.msra.mxu0 %v400
    %402 = vmatprep.subr.mxu0 0.0
    %403 = vmatpush1.msra.mxu0 0.0
    %404 = vmatprep.subr.mxu0 0.0
    %405 = vmatpush1.msra.mxu0 0.0
    %406 = vmatprep.subr.mxu0 0.0
    %407 = vmatpush1.msra.mxu0 0.0
    %408 = vmatprep.subr.mxu0 0.0
    %409 = vmatpush1.msra.mxu0 0.0
    %410 = vmatprep.subr.mxu0 0.0
    %411 = vmatpush1.msra.mxu0 0.0
    %412 = vmatprep.subr.mxu0 0.0
    %413 = vmatpush1.msra.mxu0 0.0
    %414 = vmatprep.subr.mxu0 0.0
    %415 = vmatpush1.msra.mxu0 0.0
    %416 = vmatprep.subr.mxu0 0.0
    %417 = vmatpush1.msra.mxu0 0.0
    %418 = vmatprep.subr.mxu0 0.0
    %419 = vmatpush1.msra.mxu0 0.0
    %420 = vmatprep.subr.mxu0 0.0
    %421 = vmatpush1.msra.mxu0 0.0
    %422 = vmatprep.subr.mxu0 0.0
    %423 = vmatpush1.msra.mxu0 0.0
    %424 = vmatprep.subr.mxu0 0.0
    %425 = vmatpush1.msra.mxu0 0.0
    %426 = vmatprep.subr.mxu0 0.0
    %427 = vmatpush1.msra.mxu0 0.0
    %428 = vmatprep.subr.mxu0 0.0
    %429 = vmatpush1.msra.mxu0 0.0
    %430 = vmatprep.subr.mxu0 0.0
    %431 = vmatpush1.msra.mxu0 0.0
    %432 = vmatprep.subr.mxu0 0.0
    %433 = vmatpush1.msra.mxu0 0.0
    %434 = vmatprep.mubr.f32.mxu0 0.0
    %v435 = vand.u32 %v198, 4294901760
    %436 = vmatmul.mubr.f32.gmra.mrb[0].mxu0 %v435
    %v437 = vpop.f32.mrb[0].mxu0
    %v438 = vadd.f32 %v287, %v437
    %v439 = vpop.f32.mrb[0].mxu0
    %440 = vdwg.mxu0
    %441 = vmatprep.subr.mxu0 0.0
    %v442 = vand.u32 %v167, 4294901760
    %v443 = vsub.f32 %v167, %v442
    %444 = vmatpush1.msra.mxu0 %v443
    %445 = vmatprep.subr.mxu0 0.0
    %v446 = vand.u32 %v169, 4294901760
    %v447 = vsub.f32 %v169, %v446
    %448 = vmatpush1.msra.mxu0 %v447
    %449 = vmatprep.subr.mxu0 0.0
    %v450 = vand.u32 %v171, 4294901760
    %v451 = vsub.f32 %v171, %v450
    %452 = vmatpush1.msra.mxu0 %v451
    %453 = vmatprep.subr.mxu0 0.0
    %v454 = vand.u32 %v173, 4294901760
    %v455 = vsub.f32 %v173, %v454
    %456 = vmatpush1.msra.mxu0 %v455
    %457 = vmatprep.subr.mxu0 0.0
    %v458 = vand.u32 %v175, 4294901760
    %v459 = vsub.f32 %v175, %v458
    %460 = vmatpush1.msra.mxu0 %v459
    %461 = vmatprep.subr.mxu0 0.0
    %v462 = vand.u32 %v177, 4294901760
    %v463 = vsub.f32 %v177, %v462
    %464 = vmatpush1.msra.mxu0 %v463
    %465 = vmatprep.subr.mxu0 0.0
    %v466 = vand.u32 %v179, 4294901760
    %v467 = vsub.f32 %v179, %v466
    %468 = vmatpush1.msra.mxu0 %v467
    %469 = vmatprep.subr.mxu0 0.0
    %v470 = vand.u32 %v181, 4294901760
    %v471 = vsub.f32 %v181, %v470
    %472 = vmatpush1.msra.mxu0 %v471
    %473 = vmatprep.subr.mxu0 0.0
    %v474 = vand.u32 %v183, 4294901760
    %v475 = vsub.f32 %v183, %v474
    %476 = vmatpush1.msra.mxu0 %v475
    %477 = vmatprep.subr.mxu0 0.0
    %v478 = vand.u32 %v185, 4294901760
    %v479 = vsub.f32 %v185, %v478
    %480 = vmatpush1.msra.mxu0 %v479
    %481 = vmatprep.subr.mxu0 0.0
    %v482 = vand.u32 %v187, 4294901760
    %v483 = vsub.f32 %v187, %v482
    %484 = vmatpush1.msra.mxu0 %v483
    %485 = vmatprep.subr.mxu0 0.0
    %v486 = vand.u32 %v189, 4294901760
    %v487 = vsub.f32 %v189, %v486
    %488 = vmatpush1.msra.mxu0 %v487
    %489 = vmatprep.subr.mxu0 0.0
    %v490 = vand.u32 %v191, 4294901760
    %v491 = vsub.f32 %v191, %v490
    %492 = vmatpush1.msra.mxu0 %v491
    %493 = vmatprep.subr.mxu0 0.0
    %v494 = vand.u32 %v193, 4294901760
    %v495 = vsub.f32 %v193, %v494
    %496 = vmatpush1.msra.mxu0 %v495
    %497 = vmatprep.subr.mxu0 0.0
    %v498 = vand.u32 %v195, 4294901760
    %v499 = vsub.f32 %v195, %v498
    %500 = vmatpush1.msra.mxu0 %v499
    %501 = vmatprep.subr.mxu0 0.0
    %v502 = vand.u32 %v197, 4294901760
    %v503 = vsub.f32 %v197, %v502
    %504 = vmatpush1.msra.mxu0 %v503
    %505 = vmatprep.subr.mxu0 0.0
    %506 = vmatpush1.msra.mxu0 0.0
    %507 = vmatprep.subr.mxu0 0.0
    %508 = vmatpush1.msra.mxu0 0.0
    %509 = vmatprep.subr.mxu0 0.0
    %510 = vmatpush1.msra.mxu0 0.0
    %511 = vmatprep.subr.mxu0 0.0
    %512 = vmatpush1.msra.mxu0 0.0
    %513 = vmatprep.subr.mxu0 0.0
    %514 = vmatpush1.msra.mxu0 0.0
    %515 = vmatprep.subr.mxu0 0.0
    %516 = vmatpush1.msra.mxu0 0.0
    %517 = vmatprep.subr.mxu0 0.0
    %518 = vmatpush1.msra.mxu0 0.0
    %519 = vmatprep.subr.mxu0 0.0
    %520 = vmatpush1.msra.mxu0 0.0
    %521 = vmatprep.subr.mxu0 0.0
    %522 = vmatpush1.msra.mxu0 0.0
    %523 = vmatprep.subr.mxu0 0.0
    %524 = vmatpush1.msra.mxu0 0.0
    %525 = vmatprep.subr.mxu0 0.0
    %526 = vmatpush1.msra.mxu0 0.0
    %527 = vmatprep.subr.mxu0 0.0
    %528 = vmatpush1.msra.mxu0 0.0
    %529 = vmatprep.subr.mxu0 0.0
    %530 = vmatpush1.msra.mxu0 0.0
    %531 = vmatprep.subr.mxu0 0.0
    %532 = vmatpush1.msra.mxu0 0.0
    %533 = vmatprep.subr.mxu0 0.0
    %534 = vmatpush1.msra.mxu0 0.0
    %535 = vmatprep.subr.mxu0 0.0
    %536 = vmatpush1.msra.mxu0 0.0
    %537 = vmatprep.mubr.f32.mxu0 0.0
    %v538 = vand.u32 %v198, 4294901760
    %v539 = vsub.f32 %v198, %v538
    %540 = vmatmul.mubr.f32.gmra.mrb[0].mxu0 %v539
    %v541 = vpop.f32.mrb[0].mxu0
    %v542 = vadd.f32 %v438, %v541
    %v543 = vpop.f32.mrb[0].mxu0
    %544 = vdwg.mxu0
    %545 = vmatprep.subr.mxu0 0.0
    %v546 = vand.u32 %v167, 4294901760
    %547 = vmatpush1.msra.mxu0 %v546
    %548 = vmatprep.subr.mxu0 0.0
    %v549 = vand.u32 %v169, 4294901760
    %550 = vmatpush1.msra.mxu0 %v549
    %551 = vmatprep.subr.mxu0 0.0
    %v552 = vand.u32 %v171, 4294901760
    %553 = vmatpush1.msra.mxu0 %v552
    %554 = vmatprep.subr.mxu0 0.0
    %v555 = vand.u32 %v173, 4294901760
    %556 = vmatpush1.msra.mxu0 %v555
    %557 = vmatprep.subr.mxu0 0.0
    %v558 = vand.u32 %v175, 4294901760
    %559 = vmatpush1.msra.mxu0 %v558
    %560 = vmatprep.subr.mxu0 0.0
    %v561 = vand.u32 %v177, 4294901760
    %562 = vmatpush1.msra.mxu0 %v561
    %563 = vmatprep.subr.mxu0 0.0
    %v564 = vand.u32 %v179, 4294901760
    %565 = vmatpush1.msra.mxu0 %v564
    %566 = vmatprep.subr.mxu0 0.0
    %v567 = vand.u32 %v181, 4294901760
    %568 = vmatpush1.msra.mxu0 %v567
    %569 = vmatprep.subr.mxu0 0.0
    %v570 = vand.u32 %v183, 4294901760
    %571 = vmatpush1.msra.mxu0 %v570
    %572 = vmatprep.subr.mxu0 0.0
    %v573 = vand.u32 %v185, 4294901760
    %574 = vmatpush1.msra.mxu0 %v573
    %575 = vmatprep.subr.mxu0 0.0
    %v576 = vand.u32 %v187, 4294901760
    %577 = vmatpush1.msra.mxu0 %v576
    %578 = vmatprep.subr.mxu0 0.0
    %v579 = vand.u32 %v189, 4294901760
    %580 = vmatpush1.msra.mxu0 %v579
    %581 = vmatprep.subr.mxu0 0.0
    %v582 = vand.u32 %v191, 4294901760
    %583 = vmatpush1.msra.mxu0 %v582
    %584 = vmatprep.subr.mxu0 0.0
    %v585 = vand.u32 %v193, 4294901760
    %586 = vmatpush1.msra.mxu0 %v585
    %587 = vmatprep.subr.mxu0 0.0
    %v588 = vand.u32 %v195, 4294901760
    %589 = vmatpush1.msra.mxu0 %v588
    %590 = vmatprep.subr.mxu0 0.0
    %v591 = vand.u32 %v197, 4294901760
    %592 = vmatpush1.msra.mxu0 %v591
    %593 = vmatprep.subr.mxu0 0.0
    %594 = vmatpush1.msra.mxu0 0.0
    %595 = vmatprep.subr.mxu0 0.0
    %596 = vmatpush1.msra.mxu0 0.0
    %597 = vmatprep.subr.mxu0 0.0
    %598 = vmatpush1.msra.mxu0 0.0
    %599 = vmatprep.subr.mxu0 0.0
    %600 = vmatpush1.msra.mxu0 0.0
    %601 = vmatprep.subr.mxu0 0.0
    %602 = vmatpush1.msra.mxu0 0.0
    %603 = vmatprep.subr.mxu0 0.0
    %604 = vmatpush1.msra.mxu0 0.0
    %605 = vmatprep.subr.mxu0 0.0
    %606 = vmatpush1.msra.mxu0 0.0
    %607 = vmatprep.subr.mxu0 0.0
    %608 = vmatpush1.msra.mxu0 0.0
    %609 = vmatprep.subr.mxu0 0.0
    %610 = vmatpush1.msra.mxu0 0.0
    %611 = vmatprep.subr.mxu0 0.0
    %612 = vmatpush1.msra.mxu0 0.0
    %613 = vmatprep.subr.mxu0 0.0
    %614 = vmatpush1.msra.mxu0 0.0
    %615 = vmatprep.subr.mxu0 0.0
    %616 = vmatpush1.msra.mxu0 0.0
    %617 = vmatprep.subr.mxu0 0.0
    %618 = vmatpush1.msra.mxu0 0.0
    %619 = vmatprep.subr.mxu0 0.0
    %620 = vmatpush1.msra.mxu0 0.0
    %621 = vmatprep.subr.mxu0 0.0
    %622 = vmatpush1.msra.mxu0 0.0
    %623 = vmatprep.subr.mxu0 0.0
    %624 = vmatpush1.msra.mxu0 0.0
    %625 = vmatprep.mubr.f32.mxu0 0.0
    %v626 = vand.u32 %v198, 4294901760
    %v627 = vsub.f32 %v198, %v626
    %v628 = vand.u32 %v627, 4294901760
    %629 = vmatmul.mubr.f32.gmra.mrb[0].mxu0 %v628
    %v630 = vpop.f32.mrb[0].mxu0
    %v631 = vadd.f32 %v542, %v630
    %v632 = vpop.f32.mrb[0].mxu0
    %633 = vdwg.mxu0
    %634 = vmatprep.subr.mxu0 0.0
    %v635 = vand.u32 %v167, 4294901760
    %v636 = vsub.f32 %v167, %v635
    %v637 = vand.u32 %v636, 4294901760
    %638 = vmatpush1.msra.mxu0 %v637
    %639 = vmatprep.subr.mxu0 0.0
    %v640 = vand.u32 %v169, 4294901760
    %v641 = vsub.f32 %v169, %v640
    %v642 = vand.u32 %v641, 4294901760
    %643 = vmatpush1.msra.mxu0 %v642
    %644 = vmatprep.subr.mxu0 0.0
    %v645 = vand.u32 %v171, 4294901760
    %v646 = vsub.f32 %v171, %v645
    %v647 = vand.u32 %v646, 4294901760
    %648 = vmatpush1.msra.mxu0 %v647
    %649 = vmatprep.subr.mxu0 0.0
    %v650 = vand.u32 %v173, 4294901760
    %v651 = vsub.f32 %v173, %v650
    %v652 = vand.u32 %v651, 4294901760
    %653 = vmatpush1.msra.mxu0 %v652
    %654 = vmatprep.subr.mxu0 0.0
    %v655 = vand.u32 %v175, 4294901760
    %v656 = vsub.f32 %v175, %v655
    %v657 = vand.u32 %v656, 4294901760
    %658 = vmatpush1.msra.mxu0 %v657
    %659 = vmatprep.subr.mxu0 0.0
    %v660 = vand.u32 %v177, 4294901760
    %v661 = vsub.f32 %v177, %v660
    %v662 = vand.u32 %v661, 4294901760
    %663 = vmatpush1.msra.mxu0 %v662
    %664 = vmatprep.subr.mxu0 0.0
    %v665 = vand.u32 %v179, 4294901760
    %v666 = vsub.f32 %v179, %v665
    %v667 = vand.u32 %v666, 4294901760
    %668 = vmatpush1.msra.mxu0 %v667
    %669 = vmatprep.subr.mxu0 0.0
    %v670 = vand.u32 %v181, 4294901760
    %v671 = vsub.f32 %v181, %v670
    %v672 = vand.u32 %v671, 4294901760
    %673 = vmatpush1.msra.mxu0 %v672
    %674 = vmatprep.subr.mxu0 0.0
    %v675 = vand.u32 %v183, 4294901760
    %v676 = vsub.f32 %v183, %v675
    %v677 = vand.u32 %v676, 4294901760
    %678 = vmatpush1.msra.mxu0 %v677
    %679 = vmatprep.subr.mxu0 0.0
    %v680 = vand.u32 %v185, 4294901760
    %v681 = vsub.f32 %v185, %v680
    %v682 = vand.u32 %v681, 4294901760
    %683 = vmatpush1.msra.mxu0 %v682
    %684 = vmatprep.subr.mxu0 0.0
    %v685 = vand.u32 %v187, 4294901760
    %v686 = vsub.f32 %v187, %v685
    %v687 = vand.u32 %v686, 4294901760
    %688 = vmatpush1.msra.mxu0 %v687
    %689 = vmatprep.subr.mxu0 0.0
    %v690 = vand.u32 %v189, 4294901760
    %v691 = vsub.f32 %v189, %v690
    %v692 = vand.u32 %v691, 4294901760
    %693 = vmatpush1.msra.mxu0 %v692
    %694 = vmatprep.subr.mxu0 0.0
    %v695 = vand.u32 %v191, 4294901760
    %v696 = vsub.f32 %v191, %v695
    %v697 = vand.u32 %v696, 4294901760
    %698 = vmatpush1.msra.mxu0 %v697
    %699 = vmatprep.subr.mxu0 0.0
    %v700 = vand.u32 %v193, 4294901760
    %v701 = vsub.f32 %v193, %v700
    %v702 = vand.u32 %v701, 4294901760
    %703 = vmatpush1.msra.mxu0 %v702
    %704 = vmatprep.subr.mxu0 0.0
    %v705 = vand.u32 %v195, 4294901760
    %v706 = vsub.f32 %v195, %v705
    %v707 = vand.u32 %v706, 4294901760
    %708 = vmatpush1.msra.mxu0 %v707
    %709 = vmatprep.subr.mxu0 0.0
    %v710 = vand.u32 %v197, 4294901760
    %v711 = vsub.f32 %v197, %v710
    %v712 = vand.u32 %v711, 4294901760
    %713 = vmatpush1.msra.mxu0 %v712
    %714 = vmatprep.subr.mxu0 0.0
    %715 = vmatpush1.msra.mxu0 0.0
    %716 = vmatprep.subr.mxu0 0.0
    %717 = vmatpush1.msra.mxu0 0.0
    %718 = vmatprep.subr.mxu0 0.0
    %719 = vmatpush1.msra.mxu0 0.0
    %720 = vmatprep.subr.mxu0 0.0
    %721 = vmatpush1.msra.mxu0 0.0
    %722 = vmatprep.subr.mxu0 0.0
    %723 = vmatpush1.msra.mxu0 0.0
    %724 = vmatprep.subr.mxu0 0.0
    %725 = vmatpush1.msra.mxu0 0.0
    %726 = vmatprep.subr.mxu0 0.0
    %727 = vmatpush1.msra.mxu0 0.0
    %728 = vmatprep.subr.mxu0 0.0
    %729 = vmatpush1.msra.mxu0 0.0
    %730 = vmatprep.subr.mxu0 0.0
    %731 = vmatpush1.msra.mxu0 0.0
    %732 = vmatprep.subr.mxu0 0.0
    %733 = vmatpush1.msra.mxu0 0.0
    %734 = vmatprep.subr.mxu0 0.0
    %735 = vmatpush1.msra.mxu0 0.0
    %736 = vmatprep.subr.mxu0 0.0
    %737 = vmatpush1.msra.mxu0 0.0
    %738 = vmatprep.subr.mxu0 0.0
    %739 = vmatpush1.msra.mxu0 0.0
    %740 = vmatprep.subr.mxu0 0.0
    %741 = vmatpush1.msra.mxu0 0.0
    %742 = vmatprep.subr.mxu0 0.0
    %743 = vmatpush1.msra.mxu0 0.0
    %744 = vmatprep.subr.mxu0 0.0
    %745 = vmatpush1.msra.mxu0 0.0
    %746 = vmatprep.mubr.f32.mxu0 0.0
    %v747 = vand.u32 %v198, 4294901760
    %748 = vmatmul.mubr.f32.gmra.mrb[0].mxu0 %v747
    %v749 = vpop.f32.mrb[0].mxu0
    %v750 = vadd.f32 %v631, %v749
    %v751 = vpop.f32.mrb[0].mxu0
    %752 = vdwg.mxu0
    %753 = vmatprep.subr.mxu0 0.0
    %v754 = vand.u32 %v167, 4294901760
    %755 = vmatpush1.msra.mxu0 %v754
    %756 = vmatprep.subr.mxu0 0.0
    %v757 = vand.u32 %v169, 4294901760
    %758 = vmatpush1.msra.mxu0 %v757
    %759 = vmatprep.subr.mxu0 0.0
    %v760 = vand.u32 %v171, 4294901760
    %761 = vmatpush1.msra.mxu0 %v760
    %762 = vmatprep.subr.mxu0 0.0
    %v763 = vand.u32 %v173, 4294901760
    %764 = vmatpush1.msra.mxu0 %v763
    %765 = vmatprep.subr.mxu0 0.0
    %v766 = vand.u32 %v175, 4294901760
    %767 = vmatpush1.msra.mxu0 %v766
    %768 = vmatprep.subr.mxu0 0.0
    %v769 = vand.u32 %v177, 4294901760
    %770 = vmatpush1.msra.mxu0 %v769
    %771 = vmatprep.subr.mxu0 0.0
    %v772 = vand.u32 %v179, 4294901760
    %773 = vmatpush1.msra.mxu0 %v772
    %774 = vmatprep.subr.mxu0 0.0
    %v775 = vand.u32 %v181, 4294901760
    %776 = vmatpush1.msra.mxu0 %v775
    %777 = vmatprep.subr.mxu0 0.0
    %v778 = vand.u32 %v183, 4294901760
    %779 = vmatpush1.msra.mxu0 %v778
    %780 = vmatprep.subr.mxu0 0.0
    %v781 = vand.u32 %v185, 4294901760
    %782 = vmatpush1.msra.mxu0 %v781
    %783 = vmatprep.subr.mxu0 0.0
    %v784 = vand.u32 %v187, 4294901760
    %785 = vmatpush1.msra.mxu0 %v784
    %786 = vmatprep.subr.mxu0 0.0
    %v787 = vand.u32 %v189, 4294901760
    %788 = vmatpush1.msra.mxu0 %v787
    %789 = vmatprep.subr.mxu0 0.0
    %v790 = vand.u32 %v191, 4294901760
    %791 = vmatpush1.msra.mxu0 %v790
    %792 = vmatprep.subr.mxu0 0.0
    %v793 = vand.u32 %v193, 4294901760
    %794 = vmatpush1.msra.mxu0 %v793
    %795 = vmatprep.subr.mxu0 0.0
    %v796 = vand.u32 %v195, 4294901760
    %797 = vmatpush1.msra.mxu0 %v796
    %798 = vmatprep.subr.mxu0 0.0
    %v799 = vand.u32 %v197, 4294901760
    %800 = vmatpush1.msra.mxu0 %v799
    %801 = vmatprep.subr.mxu0 0.0
    %802 = vmatpush1.msra.mxu0 0.0
    %803 = vmatprep.subr.mxu0 0.0
    %804 = vmatpush1.msra.mxu0 0.0
    %805 = vmatprep.subr.mxu0 0.0
    %806 = vmatpush1.msra.mxu0 0.0
    %807 = vmatprep.subr.mxu0 0.0
    %808 = vmatpush1.msra.mxu0 0.0
    %809 = vmatprep.subr.mxu0 0.0
    %810 = vmatpush1.msra.mxu0 0.0
    %811 = vmatprep.subr.mxu0 0.0
    %812 = vmatpush1.msra.mxu0 0.0
    %813 = vmatprep.subr.mxu0 0.0
    %814 = vmatpush1.msra.mxu0 0.0
    %815 = vmatprep.subr.mxu0 0.0
    %816 = vmatpush1.msra.mxu0 0.0
    %817 = vmatprep.subr.mxu0 0.0
    %818 = vmatpush1.msra.mxu0 0.0
    %819 = vmatprep.subr.mxu0 0.0
    %820 = vmatpush1.msra.mxu0 0.0
    %821 = vmatprep.subr.mxu0 0.0
    %822 = vmatpush1.msra.mxu0 0.0
    %823 = vmatprep.subr.mxu0 0.0
    %824 = vmatpush1.msra.mxu0 0.0
    %825 = vmatprep.subr.mxu0 0.0
    %826 = vmatpush1.msra.mxu0 0.0
    %827 = vmatprep.subr.mxu0 0.0
    %828 = vmatpush1.msra.mxu0 0.0
    %829 = vmatprep.subr.mxu0 0.0
    %830 = vmatpush1.msra.mxu0 0.0
    %831 = vmatprep.subr.mxu0 0.0
    %832 = vmatpush1.msra.mxu0 0.0
    %833 = vmatprep.mubr.f32.mxu0 0.0
    %v834 = vand.u32 %v198, 4294901760
    %835 = vmatmul.mubr.f32.gmra.mrb[0].mxu0 %v834
    %v836 = vpop.f32.mrb[0].mxu0
    %v837 = vadd.f32 %v750, %v836
    %v838 = vpop.f32.mrb[0].mxu0
    %839 = vdwg.mxu0
    %840 = vst [vmem:[#allocation7] sm:$0x3] %v837
    // Predicated region
    $region18: #{tpu_custom_call.1} parent=1 // pred_check
      _
    $region19: #{tpu_custom_call.1} parent=1 // pred_check_branch
      %842 = sbr.rel (0) target = $region21
    $region20: #{tpu_custom_call.1} parent=1 // pred_region
      %s844 = ssub.s32 32, 32
      %845 = vsyncadd [#allocation4], %s844
      %s847 = sshll.u32 [#allocation7], 4
      %s848 = int_to_ptr.vmem [resolvable:$true] %s847
      %850 = dma.vmem_to_hbm [thread:$0]  %s848, 32, %s2, [#allocation4]
    $region21: #{tpu_custom_call.1} parent=1 // pred_fallthru
      _
    // Predicated region
    $region22: #{tpu_custom_call.1} parent=1 // pred_check
      _
    $region23: #{tpu_custom_call.1} parent=1 // pred_check_branch
      %852 = sbr.rel (0) target = $region25
    $region24: #{tpu_custom_call.1} parent=1 // pred_region
      %853 = dma.done [#allocation4], 32
    $region25: #{tpu_custom_call.1} parent=1 // pred_fallthru
      _
    %854 = vsyncpa [#allocation3], 1
    %855 = vsyncpa [#allocation6], 1
    %856 = vsyncpa [#allocation4], 1

</llo_original>
